<compile_context>
chip_gen: v6e
topology: v6e:2x2x1
jax: 0.10.0
libtpu: 0.0.40
codegen_flags: <defaults>
</compile_context>

<pallas_src>
import jax
import jax.numpy as jnp
from jax.experimental import pallas as pl
from jax.experimental.pallas import tpu as pltpu


def _se_scale_kernel(x_ref, w_ref, b_ref, s_ref, o_ref):
    # x_ref: (1, C, T)  activation tile, spatial positions on lanes
    # w_ref: (C, C)     1x1 conv weight (out, in)
    # b_ref: (C, 1)     conv bias (column vector -> broadcast over lanes)
    # s_ref: (1, C, 1)  per-(batch, channel) SE scale
    # o_ref: (1, C, T)
    xc = jnp.dot(w_ref[...], x_ref[0], preferred_element_type=jnp.float32)
    o_ref[0] = ((xc + b_ref[...]) * s_ref[0]).astype(o_ref.dtype)


def _spatial_tile(hw: int, c: int) -> int:
    """Lane-dense spatial tile.

    Full extent when the image fits; otherwise the largest multiple of 128
    (capped at 2048) keeping double-buffered in+out f32 tiles near ~16 MiB.
    """
    if hw <= 2048:
        return hw
    budget = 16 * 1024 * 1024
    per_lane = c * 4 * 4            # f32, (in + out) x double-buffered
    t = (budget // max(per_lane, 1)) // 128 * 128
    return int(max(128, min(2048, t)))


def se_layer(x_nchw, wconv, bconv, w1, w2):
    """Forward pass of SElayer (y=None path).

    x_nchw : (B, C, H, W) float32
    wconv  : (C, C, 1, 1)  Conv2d weight (out, in, 1, 1)
    bconv  : (C,)          Conv2d bias
    w1     : (C//r, C)     first Linear weight (no bias)
    w2     : (C, C//r)     second Linear weight (no bias)
    returns (B, C, H, W) float32
    """
    B, C, H, W = x_nchw.shape
    HW = H * W

    # Keep NCHW: just flatten spatial (free reshape, no transpose / HBM copy).
    x = x_nchw.reshape(B, C, HW)
    wc = wconv.reshape(C, C)                         # (C_out, C_in)

    # ---- squeeze + excite, hoisted out of the streaming kernel ------------
    # mean over spatial of conv1x1(x) == conv1x1(mean over spatial of x)
    mean_x = jnp.mean(x, axis=2)                     # (B, C)
    pooled = mean_x @ wc.T + bconv[None, :]          # (B, C) == avg_pool(conv(x))
    h = jnp.maximum(pooled @ w1.T, 0.0)              # (B, C//r)
    s = jax.nn.sigmoid(h @ w2.T)                     # (B, C)
    s_col = s.reshape(B, C, 1).astype(jnp.float32)

    bcol = bconv.reshape(C, 1).astype(jnp.float32)

    # ---- streaming pass: out = (Wconv @ x + b) * s -------------------------
    T = _spatial_tile(HW, C)
    grid = (B, pl.cdiv(HW, T))

    out = pl.pallas_call(
        _se_scale_kernel,
        out_shape=jax.ShapeDtypeStruct((B, C, HW), jnp.float32),
        grid_spec=pltpu.PrefetchScalarGridSpec(
            num_scalar_prefetch=0,
            grid=grid,
            in_specs=[
                pl.BlockSpec((1, C, T), lambda b, t: (b, 0, t)),    # x tile
                pl.BlockSpec((C, C), lambda b, t: (0, 0)),          # conv weight
                pl.BlockSpec((C, 1), lambda b, t: (0, 0)),          # conv bias
                pl.BlockSpec((1, C, 1), lambda b, t: (b, 0, 0)),    # SE scale
            ],
            out_specs=pl.BlockSpec((1, C, T), lambda b, t: (b, 0, t)),
        ),
        compiler_params=pltpu.CompilerParams(
            dimension_semantics=("parallel", "parallel"),
            vmem_limit_bytes=48 * 1024 * 1024,
        ),
    )(x, wc, bcol, s_col)

    return out.reshape(B, C, H, W)


def se_layer_ref(x_nchw, wconv, bconv, w1, w2):
    """Pure-JAX reference mirroring the PyTorch module."""
    B, C, H, W = x_nchw.shape
    w = wconv.reshape(C, C)
    xc = jnp.einsum("bchw,oc->bohw", x_nchw, w) + bconv[None, :, None, None]
    y = jnp.mean(xc, axis=(2, 3))                    # (B, C)
    h = jnp.maximum(y @ w1.T, 0.0)                   # (B, C//r)
    s = jax.nn.sigmoid(h @ w2.T)                     # (B, C)
    return xc * s[:, :, None, None]


if __name__ == "__main__":
    # HW = 2304 > 2048 -> exercises the tiled spatial grid (T = 2048 + 256).
    B, C, H, W = 2, 16, 48, 48
    reduction = 8
    Cr = C // reduction

    key = jax.random.PRNGKey(0)
    kx, kw, kb, k1, k2 = jax.random.split(key, 5)

    x = jax.random.normal(kx, (B, C, H, W), dtype=jnp.float32)
    # Deterministic synthetic parameters (shapes match nn.Conv2d / nn.Linear).
    wconv = jax.random.normal(kw, (C, C, 1, 1), dtype=jnp.float32) * 0.1
    bconv = jax.random.normal(kb, (C,), dtype=jnp.float32) * 0.1
    w1 = jax.random.normal(k1, (Cr, C), dtype=jnp.float32) * 0.1
    w2 = jax.random.normal(k2, (C, Cr), dtype=jnp.float32) * 0.1

    out = se_layer(x, wconv, bconv, w1, w2)
    out = jax.block_until_ready(out)

    ref = se_layer_ref(x, wconv, bconv, w1, w2)
    assert out.shape == (B, C, H, W)
    assert jnp.allclose(out, ref, atol=1e-4, rtol=1e-4), "mismatch vs reference"

    print("KERNEL_OK")
</pallas_src>

<mosaic_0001>
module attributes {stable_mosaic.version = 11 : i64} {
  func.func @_se_scale_kernel(%arg0: i32, %arg1: i32, %arg2: memref<1x16x2048xf32, #tpu.memory_space<vmem>>, %arg3: memref<16x16xf32, #tpu.memory_space<vmem>>, %arg4: memref<16x1xf32, #tpu.memory_space<vmem>>, %arg5: memref<1x16x1xf32, #tpu.memory_space<vmem>>, %arg6: memref<1x16x2048xf32, #tpu.memory_space<vmem>>) attributes {dimension_semantics = [#tpu.dimension_semantics<parallel>, #tpu.dimension_semantics<parallel>], iteration_bounds = array<i64: 2, 2>, scalar_prefetch = 0 : i64, scratch_operands = 0 : i64, tpu.core_type = #tpu.core_type<tc>, window_params = [{transform_indices = @transform_0, window_bounds = array<i64: 1, 16, 2048>}, {pipeline_mode = #tpu.pipeline_mode<synchronous>, transform_indices = @transform_1, window_bounds = array<i64: 16, 16>}, {pipeline_mode = #tpu.pipeline_mode<synchronous>, transform_indices = @transform_2, window_bounds = array<i64: 16, 1>}, {transform_indices = @transform_3, window_bounds = array<i64: 1, 16, 1>}, {transform_indices = @transform_4, window_bounds = array<i64: 1, 16, 2048>}]} {
    %c0 = arith.constant 0 : index
    %c0_0 = arith.constant 0 : index
    %0 = vector.load %arg3[%c0, %c0_0] : memref<16x16xf32, #tpu.memory_space<vmem>>, vector<16x16xf32>
    %c0_1 = arith.constant 0 : index
    %c0_2 = arith.constant 0 : index
    %c0_3 = arith.constant 0 : index
    %1 = vector.load %arg2[%c0_1, %c0_2, %c0_3] : memref<1x16x2048xf32, #tpu.memory_space<vmem>>, vector<1x16x2048xf32>
    %2 = vector.shape_cast %1 : vector<1x16x2048xf32> to vector<16x2048xf32>
    %cst = arith.constant dense<0.000000e+00> : vector<16x2048xf32>
    %3 = tpu.matmul %0, %2, %cst {dimension_numbers = #tpu.dot_dimension_numbers<[1], [0], [0], [1], [0, 0, 1, 1], [], []>} : vector<16x16xf32>, vector<16x2048xf32>, vector<16x2048xf32> -> vector<16x2048xf32>
    %c0_4 = arith.constant 0 : index
    %c0_5 = arith.constant 0 : index
    %4 = vector.load %arg4[%c0_4, %c0_5] : memref<16x1xf32, #tpu.memory_space<vmem>>, vector<16x1xf32>
    %5 = vector.broadcast %4 : vector<16x1xf32> to vector<16x2048xf32>
    %6 = arith.addf %3, %5 : vector<16x2048xf32>
    %c0_6 = arith.constant 0 : index
    %c0_7 = arith.constant 0 : index
    %c0_8 = arith.constant 0 : index
    %7 = vector.load %arg5[%c0_6, %c0_7, %c0_8] : memref<1x16x1xf32, #tpu.memory_space<vmem>>, vector<1x16x1xf32>
    %8 = vector.shape_cast %7 : vector<1x16x1xf32> to vector<16x1xf32>
    %9 = vector.broadcast %8 : vector<16x1xf32> to vector<16x2048xf32>
    %10 = arith.mulf %6, %9 : vector<16x2048xf32>
    %c0_9 = arith.constant 0 : index
    %c0_10 = arith.constant 0 : index
    %c0_11 = arith.constant 0 : index
    %11 = vector.load %arg6[%c0_9, %c0_10, %c0_11] : memref<1x16x2048xf32, #tpu.memory_space<vmem>>, vector<1x16x2048xf32>
    %12 = vector.shape_cast %11 : vector<1x16x2048xf32> to vector<16x2048xf32>
    %13 = vector.shape_cast %10 : vector<16x2048xf32> to vector<1x16x2048xf32>
    tpu.vector_store %arg6[%c0_9, %c0_10, %c0_11], %13 {strides = array<i32>} : memref<1x16x2048xf32, #tpu.memory_space<vmem>>, vector<1x16x2048xf32>,
    return
  }
  func.func @transform_0(%arg0: i32, %arg1: i32) -> (i32, i32, i32) {
    %c0_i32 = arith.constant 0 : i32
    %c0_i32_0 = arith.constant 0 : i32
    return %arg0, %c0_i32, %arg1 : i32, i32, i32
  }
  func.func @transform_1(%arg0: i32, %arg1: i32) -> (i32, i32) {
    %c0_i32 = arith.constant 0 : i32
    %c0_i32_0 = arith.constant 0 : i32
    %c0_i32_1 = arith.constant 0 : i32
    return %c0_i32, %c0_i32_0 : i32, i32
  }
  func.func @transform_2(%arg0: i32, %arg1: i32) -> (i32, i32) {
    %c0_i32 = arith.constant 0 : i32
    %c0_i32_0 = arith.constant 0 : i32
    %c0_i32_1 = arith.constant 0 : i32
    return %c0_i32, %c0_i32_0 : i32, i32
  }
  func.func @transform_3(%arg0: i32, %arg1: i32) -> (i32, i32, i32) {
    %c0_i32 = arith.constant 0 : i32
    %c0_i32_0 = arith.constant 0 : i32
    %c0_i32_1 = arith.constant 0 : i32
    return %arg0, %c0_i32, %c0_i32_0 : i32, i32, i32
  }
  func.func @transform_4(%arg0: i32, %arg1: i32) -> (i32, i32, i32) {
    %c0_i32 = arith.constant 0 : i32
    %c0_i32_0 = arith.constant 0 : i32
    return %arg0, %c0_i32, %arg1 : i32, i32, i32
  }
}

</mosaic_0001>

<llo_original>
// kernel: tpu_custom_call.1
$region0: #{tpu_custom_call.1}
  #allocation0 [shape = 'u32[]', space=smem, size = 0x4, offset = 0x4, fixed_abs, tag = 'smem constant byte address 0x4 - core index']
  #allocation1 [shape = 'u32[144,128]{1,0:T(1,128)}', space=vmem, size = 0x12000, scoped, tag = 'internal scratch']
  %s0 = inlined_call_operand.hbm [shape: f32[2,16,2304], index: 0, kind: input, shape index: {}]
  %s1 = inlined_call_operand.vmem [shape: f32[16,16], index: 1, kind: input, shape index: {}]
  %s2 = inlined_call_operand.vmem [shape: f32[16,1], index: 2, kind: input, shape index: {}]
  %s3 = inlined_call_operand.vmem [shape: f32[2,16,1], index: 3, kind: input, shape index: {}]
  %s4 = inlined_call_operand.hbm [shape: f32[2,16,2304], index: 4, kind: output, shape index: {}]
  %s5 = sld [smem:[#allocation0]]
  $region53: #{tpu_custom_call.1} parent=0
    _
  %s7 = ssub.s32 1, %s5
  %s8 = scalar_select 0, %s7, %s5
  $region1: #{tpu_custom_call.1} parent=0
    #allocation2 [shape = 'u8[262144]{0}', space=vmem, size = 0x40000, scoped, tag = 'input window, operand 0']
    #allocation3 [shape = 's32[2]{0}', space=sflag, size = 0x8, scoped, tag = 'scoped memory for tpu_custom_call.1']
    #allocation4 [shape = 's32[2]{0}', space=sflag, size = 0x8, scoped, tag = 'scoped memory for tpu_custom_call.1']
    #allocation5 [shape = 'u8[262144]{0}', space=vmem, size = 0x40000, scoped, tag = 'output window, operand 0']
    %9 = vsyncpa [#allocation3], 0
    %s10 = scalar_lea.sflag [#allocation3], 1
    %11 = vsyncpa %s10, 0
    %12 = vsyncpa [#allocation4], 0
    %s13 = scalar_lea.sflag [#allocation4], 1
    %14 = vsyncpa %s13, 0
    loop: start=0, step=1, limit=6
    $region2: #{tpu_custom_call.1} parent=1 // loop_pre_header
      _
    $region3: #{tpu_custom_call.1} parent=1 // loop_header
      %s16 = sphi 0, %s20
      %p17 = scmp.ge.s32.totalorder %s16, 6
      %s23 = sphi 0, %s35
      %s24 = sphi 0, %s31
      %s25 = sphi 0, %s23
      %s26 = sphi 0, %s24
      %s27 = sphi 0, %s25
      %s28 = sphi 0, %s26
      %s40 = sphi 0, %s42
      %s43 = sphi 0, %s40
      %s44 = sphi 0, %s43
      %s60 = sphi 0, %s44
      %s64 = sphi 0, %s64
      %s66 = sphi 0, %s64
      %s67 = sphi 0, %s66
      %s81 = sphi 0, %s67
      %s85 = sphi 0, %s85
      %s87 = sphi 0, %s85
      %s88 = sphi 0, %s87
      %s102 = sphi 0, %s88
      %s108 = sphi 0, %s110
      %s111 = sphi 0, %s108
      %s112 = sphi 0, %s111
      %s128 = sphi 0, %s112
      %s136 = sphi 0, %s138
      %s139 = sphi 0, %s136
      %s140 = sphi 0, %s139
      %s156 = sphi 0, %s140
    $region4: #{tpu_custom_call.1} parent=1 // loop_header_branch
      %19 = sbr.rel (%p17) target = $region8
    $region5: #{tpu_custom_call.1} parent=1 // loop_body
      %s21 = ssub.s32 %s16, 1
      %s22 = ssub.s32 %s16, 2
      %s29 = sadd.s32 1, %s24
      %p30 = scmp.ge.s32.totalorder %s29, 2
      %s31 = scalar_select %p30, 0, %s29
      %s32 = sadd.s32 1, %s23
      %s33 = scalar_select %p30, %s32, %s23
      %p34 = scmp.ge.s32.totalorder %s33, 2
      %s35 = scalar_select %p34, 0, %s33
      %s36 = ssub.s32 %s23, %s35
      %s37 = ssub.s32 %s24, %s31
      %s38 = sor.u32 %s36, %s37
      %p39 = scmp.eq.s32.totalorder %s38, 0
      %s41 = sadd.s32 %s40, 1
      %s42 = scalar_select %p39, %s40, %s41
      %p45 = pneg %p39
      %p46 = scmp.eq.s32.totalorder %s16, 3
      %p47 = por %p45, %p46
      %p48 = scmp.ne.s32.totalorder %s40, %s43
      %p49 = scmp.eq.s32.totalorder %s16, 0
      %p50 = por %p48, %p49
      %p51 = scmp.ne.s32.totalorder %s40, %s43
      %p52 = scmp.eq.s32.totalorder %s21, 3
      %p53 = por %p51, %p52
      %p54 = scmp.ne.s32.totalorder %s43, %s44
      %p55 = scmp.eq.s32.totalorder %s21, 0
      %p56 = por %p54, %p55
      %p57 = scmp.ne.s32.totalorder %s43, %s44
      %p58 = scmp.eq.s32.totalorder %s22, 3
      %p59 = por %p57, %p58
      %p61 = scmp.ne.s32.totalorder %s44, %s60
      %p62 = scmp.eq.s32.totalorder %s22, 0
      %p63 = por %p61, %p62
      %s65 = sadd.s32 %s64, 1
      %p68 = scmp.eq.s32.totalorder %s16, 3
      %p69 = scmp.ne.s32.totalorder %s64, %s66
      %p70 = scmp.eq.s32.totalorder %s16, 0
      %p71 = por %p69, %p70
      %p72 = scmp.ne.s32.totalorder %s64, %s66
      %p73 = scmp.eq.s32.totalorder %s21, 3
      %p74 = por %p72, %p73
      %p75 = scmp.ne.s32.totalorder %s66, %s67
      %p76 = scmp.eq.s32.totalorder %s21, 0
      %p77 = por %p75, %p76
      %p78 = scmp.ne.s32.totalorder %s66, %s67
      %p79 = scmp.eq.s32.totalorder %s22, 3
      %p80 = por %p78, %p79
      %p82 = scmp.ne.s32.totalorder %s67, %s81
      %p83 = scmp.eq.s32.totalorder %s22, 0
      %p84 = por %p82, %p83
      %s86 = sadd.s32 %s85, 1
      %p89 = scmp.eq.s32.totalorder %s16, 3
      %p90 = scmp.ne.s32.totalorder %s85, %s87
      %p91 = scmp.eq.s32.totalorder %s16, 0
      %p92 = por %p90, %p91
      %p93 = scmp.ne.s32.totalorder %s85, %s87
      %p94 = scmp.eq.s32.totalorder %s21, 3
      %p95 = por %p93, %p94
      %p96 = scmp.ne.s32.totalorder %s87, %s88
      %p97 = scmp.eq.s32.totalorder %s21, 0
      %p98 = por %p96, %p97
      %p99 = scmp.ne.s32.totalorder %s87, %s88
      %p100 = scmp.eq.s32.totalorder %s22, 3
      %p101 = por %p99, %p100
      %p103 = scmp.ne.s32.totalorder %s88, %s102
      %p104 = scmp.eq.s32.totalorder %s22, 0
      %p105 = por %p103, %p104
      %s106 = ssub.s32 %s23, %s35
      %p107 = scmp.eq.s32.totalorder %s106, 0
      %s109 = sadd.s32 %s108, 1
      %s110 = scalar_select %p107, %s108, %s109
      %p113 = pneg %p107
      %p114 = scmp.eq.s32.totalorder %s16, 3
      %p115 = por %p113, %p114
      %p116 = scmp.ne.s32.totalorder %s108, %s111
      %p117 = scmp.eq.s32.totalorder %s16, 0
      %p118 = por %p116, %p117
      %p119 = scmp.ne.s32.totalorder %s108, %s111
      %p120 = scmp.eq.s32.totalorder %s21, 3
      %p121 = por %p119, %p120
      %p122 = scmp.ne.s32.totalorder %s111, %s112
      %p123 = scmp.eq.s32.totalorder %s21, 0
      %p124 = por %p122, %p123
      %p125 = scmp.ne.s32.totalorder %s111, %s112
      %p126 = scmp.eq.s32.totalorder %s22, 3
      %p127 = por %p125, %p126
      %p129 = scmp.ne.s32.totalorder %s112, %s128
      %p130 = scmp.eq.s32.totalorder %s22, 0
      %p131 = por %p129, %p130
      %s132 = ssub.s32 %s23, %s35
      %s133 = ssub.s32 %s24, %s31
      %s134 = sor.u32 %s132, %s133
      %p135 = scmp.eq.s32.totalorder %s134, 0
      %s137 = sadd.s32 %s136, 1
      %s138 = scalar_select %p135, %s136, %s137
      %p141 = pneg %p135
      %p142 = scmp.eq.s32.totalorder %s16, 3
      %p143 = por %p141, %p142
      %p144 = scmp.ne.s32.totalorder %s136, %s139
      %p145 = scmp.eq.s32.totalorder %s16, 0
      %p146 = por %p144, %p145
      %p147 = scmp.ne.s32.totalorder %s136, %s139
      %p148 = scmp.eq.s32.totalorder %s21, 3
      %p149 = por %p147, %p148
      %p150 = scmp.ne.s32.totalorder %s139, %s140
      %p151 = scmp.eq.s32.totalorder %s21, 0
      %p152 = por %p150, %p151
      %p153 = scmp.ne.s32.totalorder %s139, %s140
      %p154 = scmp.eq.s32.totalorder %s22, 3
      %p155 = por %p153, %p154
      %p157 = scmp.ne.s32.totalorder %s140, %s156
      %p158 = scmp.eq.s32.totalorder %s22, 0
      %p159 = por %p157, %p158
      %p160 = scmp.le.s32.totalorder 1, %s16
      %p161 = scmp.lt.s32.totalorder %s16, 5
      %p162 = pnand %p160, %p161
      %p163 = pneg %p162
      // Predicated region
      $region9: #{tpu_custom_call.1} parent=5 // pred_check
        _
      $region10: #{tpu_custom_call.1} parent=5 // pred_check_branch
        %165 = sbr.rel (%p162) target = $region12
      $region11: #{tpu_custom_call.1} parent=5 // pred_region
        %s166 = ssub.s32 %s16, 1
        // Predicated region
        $region13: #{tpu_custom_call.1} parent=11 // pred_check
          %p167 = pneg %p77
        $region14: #{tpu_custom_call.1} parent=11 // pred_check_branch
          %169 = sbr.rel (%p167) target = $region16
        $region15: #{tpu_custom_call.1} parent=11 // pred_region
          _
        $region16: #{tpu_custom_call.1} parent=11 // pred_fallthru
          _
        // Predicated region
        $region17: #{tpu_custom_call.1} parent=11 // pred_check
          %p170 = pneg %p98
        $region18: #{tpu_custom_call.1} parent=11 // pred_check_branch
          %172 = sbr.rel (%p170) target = $region20
        $region19: #{tpu_custom_call.1} parent=11 // pred_region
          _
        $region20: #{tpu_custom_call.1} parent=11 // pred_fallthru
          _
      $region12: #{tpu_custom_call.1} parent=5 // pred_fallthru
        _
      %p173 = scmp.lt.s32.totalorder %s16, 4
      // Predicated region
      $region21: #{tpu_custom_call.1} parent=5 // pred_check
        %p174 = pneg %p173
      $region22: #{tpu_custom_call.1} parent=5 // pred_check_branch
        %176 = sbr.rel (%p174) target = $region24
      $region23: #{tpu_custom_call.1} parent=5 // pred_region
        // Predicated region
        $region25: #{tpu_custom_call.1} parent=23 // pred_check
          %p177 = pneg %p50
        $region26: #{tpu_custom_call.1} parent=23 // pred_check_branch
          %179 = sbr.rel (%p177) target = $region28
        $region27: #{tpu_custom_call.1} parent=23 // pred_region
          %s180 = sand.u32 %s40, 1
          %s181 = scalar_lea.sflag [#allocation3], %s180
          %s182 = sand.u32 %s40, 1
          %s183 = smul.addr %s182, 256
          %s184 = scalar_lea.vmem [#allocation2], %s183
          %s185 = smul.u32 16, %s24
          %s186 = ssub.s32 18, %s185
          %p187 = scmp.lt.s32.totalorder %s186, 16
          %s188 = scalar_select %p187, %s186, 16
          %s189 = smul.u32 256, %s188
          %s191 = ssub.s32 4096, %s189
          %192 = vsyncadd %s181, %s191
          %p193 = scmp.ne.s32.totalorder 0, %s189
          %s194 = smul.addr %s23, 36
          %s195 = sadd.s32 %s185, %s194
          %s196 = smul.addr %s195, 128
          %s197 = scalar_lea.hbm %s0, %s196
          %s198 = smul.u32 %s188, 8
          %s199 = smul.u32 %s198, 2
          %s200 = sshll.u32 %s184, 4
          %s201 = int_to_ptr.vmem [resolvable:$true] %s200
          %s202 = sshll.u32 %s199, 4
          %206 = dma.hbm_to_vmem [thread:$0]  (%p193), %s197, %s202, %s201, %s181, 2304, 2048, %s198
        $region28: #{tpu_custom_call.1} parent=23 // pred_fallthru
          _
        // Predicated region
        $region29: #{tpu_custom_call.1} parent=23 // pred_check
          %p207 = pneg %p118
        $region30: #{tpu_custom_call.1} parent=23 // pred_check_branch
          %209 = sbr.rel (%p207) target = $region32
        $region31: #{tpu_custom_call.1} parent=23 // pred_region
          %p210 = scmp.lt.s32.totalorder %s23, 1
          %s211 = scalar_select %p210, %s23, 1
          %s212 = smul.addr %s211, 2
          %s213 = smul.addr %s212, 8
          %s214 = scalar_lea.vmem %s3, %s213
        $region32: #{tpu_custom_call.1} parent=23 // pred_fallthru
          _
      $region24: #{tpu_custom_call.1} parent=5 // pred_fallthru
        _
      %p215 = scmp.le.s32.totalorder 1, %s16
      %p216 = scmp.lt.s32.totalorder %s16, 5
      %p217 = pnand %p215, %p216
      %p218 = pneg %p217
      // Predicated region
      $region33: #{tpu_custom_call.1} parent=5 // pred_check
        _
      $region34: #{tpu_custom_call.1} parent=5 // pred_check_branch
        %220 = sbr.rel (%p217) target = $region36
      $region35: #{tpu_custom_call.1} parent=5 // pred_region
        %s221 = ssub.s32 %s16, 1
        %s222 = sand.u32 %s43, 1
        %s223 = scalar_lea.sflag [#allocation3], %s222
        %s224 = sand.u32 %s43, 1
        %s225 = smul.addr %s224, 256
        %s226 = scalar_lea.vmem [#allocation2], %s225
        // Predicated region
        $region37: #{tpu_custom_call.1} parent=35 // pred_check
          %p227 = pneg %p56
        $region38: #{tpu_custom_call.1} parent=35 // pred_check_branch
          %229 = sbr.rel (%p227) target = $region40
        $region39: #{tpu_custom_call.1} parent=35 // pred_region
          %230 = dma.done %s223, 4096
        $region40: #{tpu_custom_call.1} parent=35 // pred_fallthru
          _
        %s231 = sand.u32 %s43, 1
        %s232 = scalar_lea.sflag [#allocation3], %s231
        %s233 = sand.u32 %s43, 1
        %s234 = smul.addr %s233, 256
        %s235 = scalar_lea.vmem [#allocation2], %s234
        %p236 = pneg %p56
        %p237 = pneg %p53
        %p238 = pneg %p77
        %p239 = pneg %p74
        %p240 = pneg %p98
        %p241 = pneg %p95
        %p242 = scmp.lt.s32.totalorder %s25, 1
        %s243 = scalar_select %p242, %s25, 1
        %s244 = smul.addr %s243, 2
        %s245 = smul.addr %s244, 8
        %s246 = scalar_lea.vmem %s3, %s245
        %p247 = pneg %p124
        %p248 = pneg %p121
        %p249 = pneg %p152
        %p250 = pneg %p149
        %s251 = sand.u32 %s139, 1
        %s252 = scalar_lea.sflag [#allocation4], %s251
        %s253 = sand.u32 %s139, 1
        %s254 = smul.addr %s253, 256
        %s255 = scalar_lea.vmem [#allocation5], %s254
        %s256 = smul.u32 16, %s26
        %s257 = ssub.s32 18, %s256
        %p258 = scmp.lt.s32.totalorder %s257, 16
        %s259 = scalar_select %p258, %s257, 16
        %s260 = smul.u32 256, %s259
        %p261 = scmp.lt.s32.totalorder %s25, 1
        %s262 = scalar_select %p261, %s25, 1
        %s263 = smul.addr %s262, 2
        %s264 = smul.addr %s263, 8
        %s265 = scalar_lea.vmem %s3, %s264
        %s266 = smul.u32 16, %s26
        %s267 = ssub.s32 18, %s266
        %p268 = scmp.lt.s32.totalorder %s267, 16
        %s269 = scalar_select %p268, %s267, 16
        %s270 = smul.u32 256, %s269
        %v271 = vld [vmem:[%s1] sm:$0xff]
        %v272 = vld [vmem:[%s1 + $0x8] sm:$0xff]
        %v273 = vld [vmem:[%s226] sm:$0xff]
        %v274 = vld [vmem:[%s226 + $0x8] sm:$0xff]
        %v275 = vld [vmem:[%s226 + $0x10] sm:$0xff]
        %v276 = vld [vmem:[%s226 + $0x18] sm:$0xff]
        %v277 = vld [vmem:[%s226 + $0x20] sm:$0xff]
        %v278 = vld [vmem:[%s226 + $0x28] sm:$0xff]
        %v279 = vld [vmem:[%s226 + $0x30] sm:$0xff]
        %v280 = vld [vmem:[%s226 + $0x38] sm:$0xff]
        %v281 = vld [vmem:[%s226 + $0x40] sm:$0xff]
        %v282 = vld [vmem:[%s226 + $0x48] sm:$0xff]
        %v283 = vld [vmem:[%s226 + $0x50] sm:$0xff]
        %v284 = vld [vmem:[%s226 + $0x58] sm:$0xff]
        %v285 = vld [vmem:[%s226 + $0x60] sm:$0xff]
        %v286 = vld [vmem:[%s226 + $0x68] sm:$0xff]
        %v287 = vld [vmem:[%s226 + $0x70] sm:$0xff]
        %v288 = vld [vmem:[%s226 + $0x78] sm:$0xff]
        %v289 = vld [vmem:[%s226 + $0x80] sm:$0xff]
        %v290 = vld [vmem:[%s226 + $0x88] sm:$0xff]
        %v291 = vld [vmem:[%s226 + $0x90] sm:$0xff]
        %v292 = vld [vmem:[%s226 + $0x98] sm:$0xff]
        %v293 = vld [vmem:[%s226 + $0xa0] sm:$0xff]
        %v294 = vld [vmem:[%s226 + $0xa8] sm:$0xff]
        %v295 = vld [vmem:[%s226 + $0xb0] sm:$0xff]
        %v296 = vld [vmem:[%s226 + $0xb8] sm:$0xff]
        %v297 = vld [vmem:[%s226 + $0xc0] sm:$0xff]
        %v298 = vld [vmem:[%s226 + $0xc8] sm:$0xff]
        %v299 = vld [vmem:[%s226 + $0xd0] sm:$0xff]
        %v300 = vld [vmem:[%s226 + $0xd8] sm:$0xff]
        %v301 = vld [vmem:[%s226 + $0xe0] sm:$0xff]
        %v302 = vld [vmem:[%s226 + $0xe8] sm:$0xff]
        %v303 = vld [vmem:[%s226 + $0xf0] sm:$0xff]
        %v304 = vld [vmem:[%s226 + $0xf8] sm:$0xff]
        %v305 = vld [vmem:[%s2] sm:$0xff]
        %v306 = vld [vmem:[%s2 + $0x8] sm:$0xff]
        %308 = vset.pattern.permute.xlu0 0
        %309 = vperm.xlu0 %308, %v305
        %v310 = vpop.permute.xlu0 %309
        %313 = vset.pattern.permute.xlu0 0
        %314 = vperm.xlu0 %313, %v306
        %v315 = vpop.permute.xlu0 %314
        %vm317 = vcmask 130048
        %v319 = vsel %vm317, %v271, 0
        %v322 = vsel %vm317, %v272, 0
        %324 = vmatprep.subr.mxu0 0.0
        %325 = vmatpush1.msra.mxu0 0.0
        %326 = vmatprep.subr.mxu0 0.0
        %327 = vmatpush1.msra.mxu0 0.0
        %328 = vmatprep.subr.mxu0 0.0
        %329 = vmatpush1.msra.mxu0 0.0
        %330 = vmatprep.subr.mxu0 0.0
        %331 = vmatpush1.msra.mxu0 0.0
        %332 = vmatprep.subr.mxu0 0.0
        %333 = vmatpush1.msra.mxu0 0.0
        %334 = vmatprep.subr.mxu0 0.0
        %335 = vmatpush1.msra.mxu0 0.0
        %336 = vmatprep.subr.mxu0 0.0
        %337 = vmatpush1.msra.mxu0 0.0
        %338 = vmatprep.subr.mxu0 0.0
        %339 = vmatpush1.msra.mxu0 0.0
        %340 = vmatprep.subr.mxu0 0.0
        %341 = vmatpush1.msra.mxu0 0.0
        %342 = vmatprep.subr.mxu0 0.0
        %343 = vmatpush1.msra.mxu0 0.0
        %344 = vmatprep.subr.mxu0 0.0
        %345 = vmatpush1.msra.mxu0 0.0
        %346 = vmatprep.subr.mxu0 0.0
        %347 = vmatpush1.msra.mxu0 0.0
        %348 = vmatprep.subr.mxu0 0.0
        %349 = vmatpush1.msra.mxu0 0.0
        %350 = vmatprep.subr.mxu0 0.0
        %351 = vmatpush1.msra.mxu0 0.0
        %352 = vmatprep.subr.mxu0 %v290
        %353 = vmatpush1.msra.mxu0 %v289
        %354 = vmatprep.subr.mxu0 %v274
        %355 = vmatpush1.msra.mxu0 %v273
        %356 = vmatprep.subr.mxu0 0.0
        %357 = vmatpush2.msra.mxu0 0.0
        %358 = vmatprep.subr.mxu0 0.0
        %359 = vmatpush2.msra.mxu0 0.0
        %360 = vmatprep.subr.mxu0 0.0
        %361 = vmatpush2.msra.mxu0 0.0
        %362 = vmatprep.subr.mxu0 0.0
        %363 = vmatpush2.msra.mxu0 0.0
        %364 = vmatprep.subr.mxu0 0.0
        %365 = vmatpush2.msra.mxu0 0.0
        %366 = vmatprep.subr.mxu0 0.0
        %367 = vmatpush2.msra.mxu0 0.0
        %368 = vmatprep.subr.mxu0 0.0
        %369 = vmatpush2.msra.mxu0 0.0
        %370 = vmatprep.subr.mxu0 0.0
        %371 = vmatpush2.msra.mxu0 0.0
        %372 = vmatprep.subr.mxu0 0.0
        %373 = vmatpush2.msra.mxu0 0.0
        %374 = vmatprep.subr.mxu0 0.0
        %375 = vmatpush2.msra.mxu0 0.0
        %376 = vmatprep.subr.mxu0 0.0
        %377 = vmatpush2.msra.mxu0 0.0
        %378 = vmatprep.subr.mxu0 0.0
        %379 = vmatpush2.msra.mxu0 0.0
        %380 = vmatprep.subr.mxu0 0.0
        %381 = vmatpush2.msra.mxu0 0.0
        %382 = vmatprep.subr.mxu0 0.0
        %383 = vmatpush2.msra.mxu0 0.0
        %384 = vmatprep.subr.mxu0 0.0
        %385 = vmatpush2.msra.mxu0 0.0
        %386 = vmatprep.subr.mxu0 0.0
        %387 = vmatpush2.msra.mxu0 0.0
        %388 = vmatprep.mubr.f32.mxu0 0.0
        %389 = vmatmul.mubr.f32.gmra.mxu0 %v319
        %v390 = vpop.f32.mrf.mxu0
        %v391 = vadd.f32 %v310, %v390
        %v392 = vpop.f32.mrf.mxu0
        %v393 = vadd.f32 %v310, %v392
        %394 = vmatprep.mubr.f32.mxu0 0.0
        %395 = vmatmul.mubr.f32.gmra.mxu0 %v322
        %v396 = vpop.f32.mrf.mxu0
        %v397 = vadd.f32 %v315, %v396
        %v398 = vpop.f32.mrf.mxu0
        %v399 = vadd.f32 %v315, %v398
        %400 = vdwg.mxu0
        %401 = vmatprep.subr.mxu0 0.0
        %402 = vmatpush1.msra.mxu0 0.0
        %403 = vmatprep.subr.mxu0 0.0
        %404 = vmatpush1.msra.mxu0 0.0
        %405 = vmatprep.subr.mxu0 0.0
        %406 = vmatpush1.msra.mxu0 0.0
        %407 = vmatprep.subr.mxu0 0.0
        %408 = vmatpush1.msra.mxu0 0.0
        %409 = vmatprep.subr.mxu0 0.0
        %410 = vmatpush1.msra.mxu0 0.0
        %411 = vmatprep.subr.mxu0 0.0
        %412 = vmatpush1.msra.mxu0 0.0
        %413 = vmatprep.subr.mxu0 0.0
        %414 = vmatpush1.msra.mxu0 0.0
        %415 = vmatprep.subr.mxu0 0.0
        %416 = vmatpush1.msra.mxu0 0.0
        %417 = vmatprep.subr.mxu0 0.0
        %418 = vmatpush1.msra.mxu0 0.0
        %419 = vmatprep.subr.mxu0 0.0
        %420 = vmatpush1.msra.mxu0 0.0
        %421 = vmatprep.subr.mxu0 0.0
        %422 = vmatpush1.msra.mxu0 0.0
        %423 = vmatprep.subr.mxu0 0.0
        %424 = vmatpush1.msra.mxu0 0.0
        %425 = vmatprep.subr.mxu0 0.0
        %426 = vmatpush1.msra.mxu0 0.0
        %427 = vmatprep.subr.mxu0 0.0
        %428 = vmatpush1.msra.mxu0 0.0
        %429 = vmatprep.subr.mxu0 %v292
        %430 = vmatpush1.msra.mxu0 %v291
        %431 = vmatprep.subr.mxu0 %v276
        %432 = vmatpush1.msra.mxu0 %v275
        %433 = vmatprep.subr.mxu0 0.0
        %434 = vmatpush2.msra.mxu0 0.0
        %435 = vmatprep.subr.mxu0 0.0
        %436 = vmatpush2.msra.mxu0 0.0
        %437 = vmatprep.subr.mxu0 0.0
        %438 = vmatpush2.msra.mxu0 0.0
        %439 = vmatprep.subr.mxu0 0.0
        %440 = vmatpush2.msra.mxu0 0.0
        %441 = vmatprep.subr.mxu0 0.0
        %442 = vmatpush2.msra.mxu0 0.0
        %443 = vmatprep.subr.mxu0 0.0
        %444 = vmatpush2.msra.mxu0 0.0
        %445 = vmatprep.subr.mxu0 0.0
        %446 = vmatpush2.msra.mxu0 0.0
        %447 = vmatprep.subr.mxu0 0.0
        %448 = vmatpush2.msra.mxu0 0.0
        %449 = vmatprep.subr.mxu0 0.0
        %450 = vmatpush2.msra.mxu0 0.0
        %451 = vmatprep.subr.mxu0 0.0
        %452 = vmatpush2.msra.mxu0 0.0
        %453 = vmatprep.subr.mxu0 0.0
        %454 = vmatpush2.msra.mxu0 0.0
        %455 = vmatprep.subr.mxu0 0.0
        %456 = vmatpush2.msra.mxu0 0.0
        %457 = vmatprep.subr.mxu0 0.0
        %458 = vmatpush2.msra.mxu0 0.0
        %459 = vmatprep.subr.mxu0 0.0
        %460 = vmatpush2.msra.mxu0 0.0
        %461 = vmatprep.subr.mxu0 0.0
        %462 = vmatpush2.msra.mxu0 0.0
        %463 = vmatprep.subr.mxu0 0.0
        %464 = vmatpush2.msra.mxu0 0.0
        %465 = vmatprep.mubr.f32.mxu0 0.0
        %466 = vmatmul.mubr.f32.gmra.mxu0 %v319
        %v467 = vpop.f32.mrf.mxu0
        %v468 = vadd.f32 %v310, %v467
        %v469 = vpop.f32.mrf.mxu0
        %v470 = vadd.f32 %v310, %v469
        %471 = vmatprep.mubr.f32.mxu0 0.0
        %472 = vmatmul.mubr.f32.gmra.mxu0 %v322
        %v473 = vpop.f32.mrf.mxu0
        %v474 = vadd.f32 %v315, %v473
        %v475 = vpop.f32.mrf.mxu0
        %v476 = vadd.f32 %v315, %v475
        %477 = vdwg.mxu0
        %478 = vmatprep.subr.mxu0 0.0
        %479 = vmatpush1.msra.mxu0 0.0
        %480 = vmatprep.subr.mxu0 0.0
        %481 = vmatpush1.msra.mxu0 0.0
        %482 = vmatprep.subr.mxu0 0.0
        %483 = vmatpush1.msra.mxu0 0.0
        %484 = vmatprep.subr.mxu0 0.0
        %485 = vmatpush1.msra.mxu0 0.0
        %486 = vmatprep.subr.mxu0 0.0
        %487 = vmatpush1.msra.mxu0 0.0
        %488 = vmatprep.subr.mxu0 0.0
        %489 = vmatpush1.msra.mxu0 0.0
        %490 = vmatprep.subr.mxu0 0.0
        %491 = vmatpush1.msra.mxu0 0.0
        %492 = vmatprep.subr.mxu0 0.0
        %493 = vmatpush1.msra.mxu0 0.0
        %494 = vmatprep.subr.mxu0 0.0
        %495 = vmatpush1.msra.mxu0 0.0
        %496 = vmatprep.subr.mxu0 0.0
        %497 = vmatpush1.msra.mxu0 0.0
        %498 = vmatprep.subr.mxu0 0.0
        %499 = vmatpush1.msra.mxu0 0.0
        %500 = vmatprep.subr.mxu0 0.0
        %501 = vmatpush1.msra.mxu0 0.0
        %502 = vmatprep.subr.mxu0 0.0
        %503 = vmatpush1.msra.mxu0 0.0
        %504 = vmatprep.subr.mxu0 0.0
        %505 = vmatpush1.msra.mxu0 0.0
        %506 = vmatprep.subr.mxu0 %v294
        %507 = vmatpush1.msra.mxu0 %v293
        %508 = vmatprep.subr.mxu0 %v278
        %509 = vmatpush1.msra.mxu0 %v277
        %510 = vmatprep.subr.mxu0 0.0
        %511 = vmatpush2.msra.mxu0 0.0
        %512 = vmatprep.subr.mxu0 0.0
        %513 = vmatpush2.msra.mxu0 0.0
        %514 = vmatprep.subr.mxu0 0.0
        %515 = vmatpush2.msra.mxu0 0.0
        %516 = vmatprep.subr.mxu0 0.0
        %517 = vmatpush2.msra.mxu0 0.0
        %518 = vmatprep.subr.mxu0 0.0
        %519 = vmatpush2.msra.mxu0 0.0
        %520 = vmatprep.subr.mxu0 0.0
        %521 = vmatpush2.msra.mxu0 0.0
        %522 = vmatprep.subr.mxu0 0.0
        %523 = vmatpush2.msra.mxu0 0.0
        %524 = vmatprep.subr.mxu0 0.0
        %525 = vmatpush2.msra.mxu0 0.0
        %526 = vmatprep.subr.mxu0 0.0
        %527 = vmatpush2.msra.mxu0 0.0
        %528 = vmatprep.subr.mxu0 0.0
        %529 = vmatpush2.msra.mxu0 0.0
        %530 = vmatprep.subr.mxu0 0.0
        %531 = vmatpush2.msra.mxu0 0.0
        %532 = vmatprep.subr.mxu0 0.0
        %533 = vmatpush2.msra.mxu0 0.0
        %534 = vmatprep.subr.mxu0 0.0
        %535 = vmatpush2.msra.mxu0 0.0
        %536 = vmatprep.subr.mxu0 0.0
        %537 = vmatpush2.msra.mxu0 0.0
        %538 = vmatprep.subr.mxu0 0.0
        %539 = vmatpush2.msra.mxu0 0.0
        %540 = vmatprep.subr.mxu0 0.0
        %541 = vmatpush2.msra.mxu0 0.0
        %542 = vmatprep.mubr.f32.mxu0 0.0
        %543 = vmatmul.mubr.f32.gmra.mxu0 %v319
        %v544 = vpop.f32.mrf.mxu0
        %v545 = vadd.f32 %v310, %v544
        %v546 = vpop.f32.mrf.mxu0
        %v547 = vadd.f32 %v310, %v546
        %548 = vmatprep.mubr.f32.mxu0 0.0
        %549 = vmatmul.mubr.f32.gmra.mxu0 %v322
        %v550 = vpop.f32.mrf.mxu0
        %v551 = vadd.f32 %v315, %v550
        %v552 = vpop.f32.mrf.mxu0
        %v553 = vadd.f32 %v315, %v552
        %554 = vdwg.mxu0
        %555 = vmatprep.subr.mxu0 0.0
        %556 = vmatpush1.msra.mxu0 0.0
        %557 = vmatprep.subr.mxu0 0.0
        %558 = vmatpush1.msra.mxu0 0.0
        %559 = vmatprep.subr.mxu0 0.0
        %560 = vmatpush1.msra.mxu0 0.0
        %561 = vmatprep.subr.mxu0 0.0
        %562 = vmatpush1.msra.mxu0 0.0
        %563 = vmatprep.subr.mxu0 0.0
        %564 = vmatpush1.msra.mxu0 0.0
        %565 = vmatprep.subr.mxu0 0.0
        %566 = vmatpush1.msra.mxu0 0.0
        %567 = vmatprep.subr.mxu0 0.0
        %568 = vmatpush1.msra.mxu0 0.0
        %569 = vmatprep.subr.mxu0 0.0
        %570 = vmatpush1.msra.mxu0 0.0
        %571 = vmatprep.subr.mxu0 0.0
        %572 = vmatpush1.msra.mxu0 0.0
        %573 = vmatprep.subr.mxu0 0.0
        %574 = vmatpush1.msra.mxu0 0.0
        %575 = vmatprep.subr.mxu0 0.0
        %576 = vmatpush1.msra.mxu0 0.0
        %577 = vmatprep.subr.mxu0 0.0
        %578 = vmatpush1.msra.mxu0 0.0
        %579 = vmatprep.subr.mxu0 0.0
        %580 = vmatpush1.msra.mxu0 0.0
        %581 = vmatprep.subr.mxu0 0.0
        %582 = vmatpush1.msra.mxu0 0.0
        %583 = vmatprep.subr.mxu0 %v296
        %584 = vmatpush1.msra.mxu0 %v295
        %585 = vmatprep.subr.mxu0 %v280
        %586 = vmatpush1.msra.mxu0 %v279
        %587 = vmatprep.subr.mxu0 0.0
        %588 = vmatpush2.msra.mxu0 0.0
        %589 = vmatprep.subr.mxu0 0.0
        %590 = vmatpush2.msra.mxu0 0.0
        %591 = vmatprep.subr.mxu0 0.0
        %592 = vmatpush2.msra.mxu0 0.0
        %593 = vmatprep.subr.mxu0 0.0
        %594 = vmatpush2.msra.mxu0 0.0
        %595 = vmatprep.subr.mxu0 0.0
        %596 = vmatpush2.msra.mxu0 0.0
        %597 = vmatprep.subr.mxu0 0.0
        %598 = vmatpush2.msra.mxu0 0.0
        %599 = vmatprep.subr.mxu0 0.0
        %600 = vmatpush2.msra.mxu0 0.0
        %601 = vmatprep.subr.mxu0 0.0
        %602 = vmatpush2.msra.mxu0 0.0
        %603 = vmatprep.subr.mxu0 0.0
        %604 = vmatpush2.msra.mxu0 0.0
        %605 = vmatprep.subr.mxu0 0.0
        %606 = vmatpush2.msra.mxu0 0.0
        %607 = vmatprep.subr.mxu0 0.0
        %608 = vmatpush2.msra.mxu0 0.0
        %609 = vmatprep.subr.mxu0 0.0
        %610 = vmatpush2.msra.mxu0 0.0
        %611 = vmatprep.subr.mxu0 0.0
        %612 = vmatpush2.msra.mxu0 0.0
        %613 = vmatprep.subr.mxu0 0.0
        %614 = vmatpush2.msra.mxu0 0.0
        %615 = vmatprep.subr.mxu0 0.0
        %616 = vmatpush2.msra.mxu0 0.0
        %617 = vmatprep.subr.mxu0 0.0
        %618 = vmatpush2.msra.mxu0 0.0
        %619 = vmatprep.mubr.f32.mxu0 0.0
        %620 = vmatmul.mubr.f32.gmra.mxu0 %v319
        %v621 = vpop.f32.mrf.mxu0
        %v622 = vadd.f32 %v310, %v621
        %v623 = vpop.f32.mrf.mxu0
        %v624 = vadd.f32 %v310, %v623
        %625 = vmatprep.mubr.f32.mxu0 0.0
        %626 = vmatmul.mubr.f32.gmra.mxu0 %v322
        %v627 = vpop.f32.mrf.mxu0
        %v628 = vadd.f32 %v315, %v627
        %v629 = vpop.f32.mrf.mxu0
        %v630 = vadd.f32 %v315, %v629
        %631 = vdwg.mxu0
        %632 = vmatprep.subr.mxu0 0.0
        %633 = vmatpush1.msra.mxu0 0.0
        %634 = vmatprep.subr.mxu0 0.0
        %635 = vmatpush1.msra.mxu0 0.0
        %636 = vmatprep.subr.mxu0 0.0
        %637 = vmatpush1.msra.mxu0 0.0
        %638 = vmatprep.subr.mxu0 0.0
        %639 = vmatpush1.msra.mxu0 0.0
        %640 = vmatprep.subr.mxu0 0.0
        %641 = vmatpush1.msra.mxu0 0.0
        %642 = vmatprep.subr.mxu0 0.0
        %643 = vmatpush1.msra.mxu0 0.0
        %644 = vmatprep.subr.mxu0 0.0
        %645 = vmatpush1.msra.mxu0 0.0
        %646 = vmatprep.subr.mxu0 0.0
        %647 = vmatpush1.msra.mxu0 0.0
        %648 = vmatprep.subr.mxu0 0.0
        %649 = vmatpush1.msra.mxu0 0.0
        %650 = vmatprep.subr.mxu0 0.0
        %651 = vmatpush1.msra.mxu0 0.0
        %652 = vmatprep.subr.mxu0 0.0
        %653 = vmatpush1.msra.mxu0 0.0
        %654 = vmatprep.subr.mxu0 0.0
        %655 = vmatpush1.msra.mxu0 0.0
        %656 = vmatprep.subr.mxu0 0.0
        %657 = vmatpush1.msra.mxu0 0.0
        %658 = vmatprep.subr.mxu0 0.0
        %659 = vmatpush1.msra.mxu0 0.0
        %660 = vmatprep.subr.mxu0 %v298
        %661 = vmatpush1.msra.mxu0 %v297
        %662 = vmatprep.subr.mxu0 %v282
        %663 = vmatpush1.msra.mxu0 %v281
        %664 = vmatprep.subr.mxu0 0.0
        %665 = vmatpush2.msra.mxu0 0.0
        %666 = vmatprep.subr.mxu0 0.0
        %667 = vmatpush2.msra.mxu0 0.0
        %668 = vmatprep.subr.mxu0 0.0
        %669 = vmatpush2.msra.mxu0 0.0
        %670 = vmatprep.subr.mxu0 0.0
        %671 = vmatpush2.msra.mxu0 0.0
        %672 = vmatprep.subr.mxu0 0.0
        %673 = vmatpush2.msra.mxu0 0.0
        %674 = vmatprep.subr.mxu0 0.0
        %675 = vmatpush2.msra.mxu0 0.0
        %676 = vmatprep.subr.mxu0 0.0
        %677 = vmatpush2.msra.mxu0 0.0
        %678 = vmatprep.subr.mxu0 0.0
        %679 = vmatpush2.msra.mxu0 0.0
        %680 = vmatprep.subr.mxu0 0.0
        %681 = vmatpush2.msra.mxu0 0.0
        %682 = vmatprep.subr.mxu0 0.0
        %683 = vmatpush2.msra.mxu0 0.0
        %684 = vmatprep.subr.mxu0 0.0
        %685 = vmatpush2.msra.mxu0 0.0
        %686 = vmatprep.subr.mxu0 0.0
        %687 = vmatpush2.msra.mxu0 0.0
        %688 = vmatprep.subr.mxu0 0.0
        %689 = vmatpush2.msra.mxu0 0.0
        %690 = vmatprep.subr.mxu0 0.0
        %691 = vmatpush2.msra.mxu0 0.0
        %692 = vmatprep.subr.mxu0 0.0
        %693 = vmatpush2.msra.mxu0 0.0
        %694 = vmatprep.subr.mxu0 0.0
        %695 = vmatpush2.msra.mxu0 0.0
        %696 = vmatprep.mubr.f32.mxu0 0.0
        %697 = vmatmul.mubr.f32.gmra.mxu0 %v319
        %v698 = vpop.f32.mrf.mxu0
        %v699 = vadd.f32 %v310, %v698
        %v700 = vpop.f32.mrf.mxu0
        %v701 = vadd.f32 %v310, %v700
        %702 = vmatprep.mubr.f32.mxu0 0.0
        %703 = vmatmul.mubr.f32.gmra.mxu0 %v322
        %v704 = vpop.f32.mrf.mxu0
        %v705 = vadd.f32 %v315, %v704
        %v706 = vpop.f32.mrf.mxu0
        %v707 = vadd.f32 %v315, %v706
        %708 = vdwg.mxu0
        %709 = vmatprep.subr.mxu0 0.0
        %710 = vmatpush1.msra.mxu0 0.0
        %711 = vmatprep.subr.mxu0 0.0
        %712 = vmatpush1.msra.mxu0 0.0
        %713 = vmatprep.subr.mxu0 0.0
        %714 = vmatpush1.msra.mxu0 0.0
        %715 = vmatprep.subr.mxu0 0.0
        %716 = vmatpush1.msra.mxu0 0.0
        %717 = vmatprep.subr.mxu0 0.0
        %718 = vmatpush1.msra.mxu0 0.0
        %719 = vmatprep.subr.mxu0 0.0
        %720 = vmatpush1.msra.mxu0 0.0
        %721 = vmatprep.subr.mxu0 0.0
        %722 = vmatpush1.msra.mxu0 0.0
        %723 = vmatprep.subr.mxu0 0.0
        %724 = vmatpush1.msra.mxu0 0.0
        %725 = vmatprep.subr.mxu0 0.0
        %726 = vmatpush1.msra.mxu0 0.0
        %727 = vmatprep.subr.mxu0 0.0
        %728 = vmatpush1.msra.mxu0 0.0
        %729 = vmatprep.subr.mxu0 0.0
        %730 = vmatpush1.msra.mxu0 0.0
        %731 = vmatprep.subr.mxu0 0.0
        %732 = vmatpush1.msra.mxu0 0.0
        %733 = vmatprep.subr.mxu0 0.0
        %734 = vmatpush1.msra.mxu0 0.0
        %735 = vmatprep.subr.mxu0 0.0
        %736 = vmatpush1.msra.mxu0 0.0
        %737 = vmatprep.subr.mxu0 %v300
        %738 = vmatpush1.msra.mxu0 %v299
        %739 = vmatprep.subr.mxu0 %v284
        %740 = vmatpush1.msra.mxu0 %v283
        %741 = vmatprep.subr.mxu0 0.0
        %742 = vmatpush2.msra.mxu0 0.0
        %743 = vmatprep.subr.mxu0 0.0
        %744 = vmatpush2.msra.mxu0 0.0
        %745 = vmatprep.subr.mxu0 0.0
        %746 = vmatpush2.msra.mxu0 0.0
        %747 = vmatprep.subr.mxu0 0.0
        %748 = vmatpush2.msra.mxu0 0.0
        %749 = vmatprep.subr.mxu0 0.0
        %750 = vmatpush2.msra.mxu0 0.0
        %751 = vmatprep.subr.mxu0 0.0
        %752 = vmatpush2.msra.mxu0 0.0
        %753 = vmatprep.subr.mxu0 0.0
        %754 = vmatpush2.msra.mxu0 0.0
        %755 = vmatprep.subr.mxu0 0.0
        %756 = vmatpush2.msra.mxu0 0.0
        %757 = vmatprep.subr.mxu0 0.0
        %758 = vmatpush2.msra.mxu0 0.0
        %759 = vmatprep.subr.mxu0 0.0
        %760 = vmatpush2.msra.mxu0 0.0
        %761 = vmatprep.subr.mxu0 0.0
        %762 = vmatpush2.msra.mxu0 0.0
        %763 = vmatprep.subr.mxu0 0.0
        %764 = vmatpush2.msra.mxu0 0.0
        %765 = vmatprep.subr.mxu0 0.0
        %766 = vmatpush2.msra.mxu0 0.0
        %767 = vmatprep.subr.mxu0 0.0
        %768 = vmatpush2.msra.mxu0 0.0
        %769 = vmatprep.subr.mxu0 0.0
        %770 = vmatpush2.msra.mxu0 0.0
        %771 = vmatprep.subr.mxu0 0.0
        %772 = vmatpush2.msra.mxu0 0.0
        %773 = vmatprep.mubr.f32.mxu0 0.0
        %774 = vmatmul.mubr.f32.gmra.mxu0 %v319
        %v775 = vpop.f32.mrf.mxu0
        %v776 = vadd.f32 %v310, %v775
        %v777 = vpop.f32.mrf.mxu0
        %v778 = vadd.f32 %v310, %v777
        %779 = vmatprep.mubr.f32.mxu0 0.0
        %780 = vmatmul.mubr.f32.gmra.mxu0 %v322
        %v781 = vpop.f32.mrf.mxu0
        %v782 = vadd.f32 %v315, %v781
        %v783 = vpop.f32.mrf.mxu0
        %v784 = vadd.f32 %v315, %v783
        %785 = vdwg.mxu0
        %786 = vmatprep.subr.mxu0 0.0
        %787 = vmatpush1.msra.mxu0 0.0
        %788 = vmatprep.subr.mxu0 0.0
        %789 = vmatpush1.msra.mxu0 0.0
        %790 = vmatprep.subr.mxu0 0.0
        %791 = vmatpush1.msra.mxu0 0.0
        %792 = vmatprep.subr.mxu0 0.0
        %793 = vmatpush1.msra.mxu0 0.0
        %794 = vmatprep.subr.mxu0 0.0
        %795 = vmatpush1.msra.mxu0 0.0
        %796 = vmatprep.subr.mxu0 0.0
        %797 = vmatpush1.msra.mxu0 0.0
        %798 = vmatprep.subr.mxu0 0.0
        %799 = vmatpush1.msra.mxu0 0.0
        %800 = vmatprep.subr.mxu0 0.0
        %801 = vmatpush1.msra.mxu0 0.0
        %802 = vmatprep.subr.mxu0 0.0
        %803 = vmatpush1.msra.mxu0 0.0
        %804 = vmatprep.subr.mxu0 0.0
        %805 = vmatpush1.msra.mxu0 0.0
        %806 = vmatprep.subr.mxu0 0.0
        %807 = vmatpush1.msra.mxu0 0.0
        %808 = vmatprep.subr.mxu0 0.0
        %809 = vmatpush1.msra.mxu0 0.0
        %810 = vmatprep.subr.mxu0 0.0
        %811 = vmatpush1.msra.mxu0 0.0
        %812 = vmatprep.subr.mxu0 0.0
        %813 = vmatpush1.msra.mxu0 0.0
        %814 = vmatprep.subr.mxu0 %v302
        %815 = vmatpush1.msra.mxu0 %v301
        %816 = vmatprep.subr.mxu0 %v286
        %817 = vmatpush1.msra.mxu0 %v285
        %818 = vmatprep.subr.mxu0 0.0
        %819 = vmatpush2.msra.mxu0 0.0
        %820 = vmatprep.subr.mxu0 0.0
        %821 = vmatpush2.msra.mxu0 0.0
        %822 = vmatprep.subr.mxu0 0.0
        %823 = vmatpush2.msra.mxu0 0.0
        %824 = vmatprep.subr.mxu0 0.0
        %825 = vmatpush2.msra.mxu0 0.0
        %826 = vmatprep.subr.mxu0 0.0
        %827 = vmatpush2.msra.mxu0 0.0
        %828 = vmatprep.subr.mxu0 0.0
        %829 = vmatpush2.msra.mxu0 0.0
        %830 = vmatprep.subr.mxu0 0.0
        %831 = vmatpush2.msra.mxu0 0.0
        %832 = vmatprep.subr.mxu0 0.0
        %833 = vmatpush2.msra.mxu0 0.0
        %834 = vmatprep.subr.mxu0 0.0
        %835 = vmatpush2.msra.mxu0 0.0
        %836 = vmatprep.subr.mxu0 0.0
        %837 = vmatpush2.msra.mxu0 0.0
        %838 = vmatprep.subr.mxu0 0.0
        %839 = vmatpush2.msra.mxu0 0.0
        %840 = vmatprep.subr.mxu0 0.0
        %841 = vmatpush2.msra.mxu0 0.0
        %842 = vmatprep.subr.mxu0 0.0
        %843 = vmatpush2.msra.mxu0 0.0
        %844 = vmatprep.subr.mxu0 0.0
        %845 = vmatpush2.msra.mxu0 0.0
        %846 = vmatprep.subr.mxu0 0.0
        %847 = vmatpush2.msra.mxu0 0.0
        %848 = vmatprep.subr.mxu0 0.0
        %849 = vmatpush2.msra.mxu0 0.0
        %850 = vmatprep.mubr.f32.mxu0 0.0
        %851 = vmatmul.mubr.f32.gmra.mxu0 %v319
        %v852 = vpop.f32.mrf.mxu0
        %v853 = vadd.f32 %v310, %v852
        %v854 = vpop.f32.mrf.mxu0
        %v855 = vadd.f32 %v310, %v854
        %856 = vmatprep.mubr.f32.mxu0 0.0
        %857 = vmatmul.mubr.f32.gmra.mxu0 %v322
        %v858 = vpop.f32.mrf.mxu0
        %v859 = vadd.f32 %v315, %v858
        %v860 = vpop.f32.mrf.mxu0
        %v861 = vadd.f32 %v315, %v860
        %862 = vdwg.mxu0
        %863 = vmatprep.subr.mxu0 0.0
        %864 = vmatpush1.msra.mxu0 0.0
        %865 = vmatprep.subr.mxu0 0.0
        %866 = vmatpush1.msra.mxu0 0.0
        %867 = vmatprep.subr.mxu0 0.0
        %868 = vmatpush1.msra.mxu0 0.0
        %869 = vmatprep.subr.mxu0 0.0
        %870 = vmatpush1.msra.mxu0 0.0
        %871 = vmatprep.subr.mxu0 0.0
        %872 = vmatpush1.msra.mxu0 0.0
        %873 = vmatprep.subr.mxu0 0.0
        %874 = vmatpush1.msra.mxu0 0.0
        %875 = vmatprep.subr.mxu0 0.0
        %876 = vmatpush1.msra.mxu0 0.0
        %877 = vmatprep.subr.mxu0 0.0
        %878 = vmatpush1.msra.mxu0 0.0
        %879 = vmatprep.subr.mxu0 0.0
        %880 = vmatpush1.msra.mxu0 0.0
        %881 = vmatprep.subr.mxu0 0.0
        %882 = vmatpush1.msra.mxu0 0.0
        %883 = vmatprep.subr.mxu0 0.0
        %884 = vmatpush1.msra.mxu0 0.0
        %885 = vmatprep.subr.mxu0 0.0
        %886 = vmatpush1.msra.mxu0 0.0
        %887 = vmatprep.subr.mxu0 0.0
        %888 = vmatpush1.msra.mxu0 0.0
        %889 = vmatprep.subr.mxu0 0.0
        %890 = vmatpush1.msra.mxu0 0.0
        %891 = vmatprep.subr.mxu0 %v304
        %892 = vmatpush1.msra.mxu0 %v303
        %893 = vmatprep.subr.mxu0 %v288
        %894 = vmatpush1.msra.mxu0 %v287
        %895 = vmatprep.subr.mxu0 0.0
        %896 = vmatpush2.msra.mxu0 0.0
        %897 = vmatprep.subr.mxu0 0.0
        %898 = vmatpush2.msra.mxu0 0.0
        %899 = vmatprep.subr.mxu0 0.0
        %900 = vmatpush2.msra.mxu0 0.0
        %901 = vmatprep.subr.mxu0 0.0
        %902 = vmatpush2.msra.mxu0 0.0
        %903 = vmatprep.subr.mxu0 0.0
        %904 = vmatpush2.msra.mxu0 0.0
        %905 = vmatprep.subr.mxu0 0.0
        %906 = vmatpush2.msra.mxu0 0.0
        %907 = vmatprep.subr.mxu0 0.0
        %908 = vmatpush2.msra.mxu0 0.0
        %909 = vmatprep.subr.mxu0 0.0
        %910 = vmatpush2.msra.mxu0 0.0
        %911 = vmatprep.subr.mxu0 0.0
        %912 = vmatpush2.msra.mxu0 0.0
        %913 = vmatprep.subr.mxu0 0.0
        %914 = vmatpush2.msra.mxu0 0.0
        %915 = vmatprep.subr.mxu0 0.0
        %916 = vmatpush2.msra.mxu0 0.0
        %917 = vmatprep.subr.mxu0 0.0
        %918 = vmatpush2.msra.mxu0 0.0
        %919 = vmatprep.subr.mxu0 0.0
        %920 = vmatpush2.msra.mxu0 0.0
        %921 = vmatprep.subr.mxu0 0.0
        %922 = vmatpush2.msra.mxu0 0.0
        %923 = vmatprep.subr.mxu0 0.0
        %924 = vmatpush2.msra.mxu0 0.0
        %925 = vmatprep.subr.mxu0 0.0
        %926 = vmatpush2.msra.mxu0 0.0
        %927 = vmatprep.mubr.f32.mxu0 0.0
        %928 = vmatmul.mubr.f32.gmra.mxu0 %v319
        %v929 = vpop.f32.mrf.mxu0
        %v930 = vadd.f32 %v310, %v929
        %v931 = vpop.f32.mrf.mxu0
        %v932 = vadd.f32 %v310, %v931
        %933 = vmatprep.mubr.f32.mxu0 0.0
        %934 = vmatmul.mubr.f32.gmra.mxu0 %v322
        %v935 = vpop.f32.mrf.mxu0
        %v936 = vadd.f32 %v315, %v935
        %v937 = vpop.f32.mrf.mxu0
        %v938 = vadd.f32 %v315, %v937
        %939 = vdwg.mxu0
        %v940 = vld [vmem:[%s265] sm:$0xff]
        %v941 = vld [vmem:[%s265 + $0x8] sm:$0xff]
        %943 = vset.pattern.permute.xlu0 0
        %944 = vperm.xlu0 %943, %v940
        %v945 = vpop.permute.xlu0 %944
        %948 = vset.pattern.permute.xlu0 0
        %949 = vperm.xlu0 %948, %v941
        %v950 = vpop.permute.xlu0 %949
        %v952 = vmul.f32 %v391, %v945
        %v953 = vmul.f32 %v393, %v945
        %v954 = vmul.f32 %v468, %v945
        %v955 = vmul.f32 %v470, %v945
        %v956 = vmul.f32 %v545, %v945
        %v957 = vmul.f32 %v547, %v945
        %v958 = vmul.f32 %v622, %v945
        %v959 = vmul.f32 %v624, %v945
        %v960 = vmul.f32 %v699, %v945
        %v961 = vmul.f32 %v701, %v945
        %v962 = vmul.f32 %v776, %v945
        %v963 = vmul.f32 %v778, %v945
        %v964 = vmul.f32 %v853, %v945
        %v965 = vmul.f32 %v855, %v945
        %v966 = vmul.f32 %v930, %v945
        %v967 = vmul.f32 %v932, %v945
        %v968 = vmul.f32 %v397, %v950
        %v969 = vmul.f32 %v399, %v950
        %v970 = vmul.f32 %v474, %v950
        %v971 = vmul.f32 %v476, %v950
        %v972 = vmul.f32 %v551, %v950
        %v973 = vmul.f32 %v553, %v950
        %v974 = vmul.f32 %v628, %v950
        %v975 = vmul.f32 %v630, %v950
        %v976 = vmul.f32 %v705, %v950
        %v977 = vmul.f32 %v707, %v950
        %v978 = vmul.f32 %v782, %v950
        %v979 = vmul.f32 %v784, %v950
        %v980 = vmul.f32 %v859, %v950
        %v981 = vmul.f32 %v861, %v950
        %v982 = vmul.f32 %v936, %v950
        %v983 = vmul.f32 %v938, %v950
        %984 = vst [vmem:[%s255] sm:$0xff] %v952
        %985 = vst [vmem:[%s255 + $0x8] sm:$0xff] %v953
        %986 = vst [vmem:[%s255 + $0x10] sm:$0xff] %v954
        %987 = vst [vmem:[%s255 + $0x18] sm:$0xff] %v955
        %988 = vst [vmem:[%s255 + $0x20] sm:$0xff] %v956
        %989 = vst [vmem:[%s255 + $0x28] sm:$0xff] %v957
        %990 = vst [vmem:[%s255 + $0x30] sm:$0xff] %v958
        %991 = vst [vmem:[%s255 + $0x38] sm:$0xff] %v959
        %992 = vst [vmem:[%s255 + $0x40] sm:$0xff] %v960
        %993 = vst [vmem:[%s255 + $0x48] sm:$0xff] %v961
        %994 = vst [vmem:[%s255 + $0x50] sm:$0xff] %v962
        %995 = vst [vmem:[%s255 + $0x58] sm:$0xff] %v963
        %996 = vst [vmem:[%s255 + $0x60] sm:$0xff] %v964
        %997 = vst [vmem:[%s255 + $0x68] sm:$0xff] %v965
        %998 = vst [vmem:[%s255 + $0x70] sm:$0xff] %v966
        %999 = vst [vmem:[%s255 + $0x78] sm:$0xff] %v967
        %1000 = vst [vmem:[%s255 + $0x80] sm:$0xff] %v968
        %1001 = vst [vmem:[%s255 + $0x88] sm:$0xff] %v969
        %1002 = vst [vmem:[%s255 + $0x90] sm:$0xff] %v970
        %1003 = vst [vmem:[%s255 + $0x98] sm:$0xff] %v971
        %1004 = vst [vmem:[%s255 + $0xa0] sm:$0xff] %v972
        %1005 = vst [vmem:[%s255 + $0xa8] sm:$0xff] %v973
        %1006 = vst [vmem:[%s255 + $0xb0] sm:$0xff] %v974
        %1007 = vst [vmem:[%s255 + $0xb8] sm:$0xff] %v975
        %1008 = vst [vmem:[%s255 + $0xc0] sm:$0xff] %v976
        %1009 = vst [vmem:[%s255 + $0xc8] sm:$0xff] %v977
        %1010 = vst [vmem:[%s255 + $0xd0] sm:$0xff] %v978
        %1011 = vst [vmem:[%s255 + $0xd8] sm:$0xff] %v979
        %1012 = vst [vmem:[%s255 + $0xe0] sm:$0xff] %v980
        %1013 = vst [vmem:[%s255 + $0xe8] sm:$0xff] %v981
        %1014 = vst [vmem:[%s255 + $0xf0] sm:$0xff] %v982
        %1015 = vst [vmem:[%s255 + $0xf8] sm:$0xff] %v983
        %s1016 = sand.u32 %s139, 1
        %s1017 = scalar_lea.sflag [#allocation4], %s1016
        %s1018 = sand.u32 %s139, 1
        %s1019 = smul.addr %s1018, 256
        %s1020 = scalar_lea.vmem [#allocation5], %s1019
        // Predicated region
        $region41: #{tpu_custom_call.1} parent=35 // pred_check
          %p1021 = pneg %p149
        $region42: #{tpu_custom_call.1} parent=35 // pred_check_branch
          %1023 = sbr.rel (%p1021) target = $region44
        $region43: #{tpu_custom_call.1} parent=35 // pred_region
          %s1024 = smul.u32 16, %s26
          %s1025 = ssub.s32 18, %s1024
          %p1026 = scmp.lt.s32.totalorder %s1025, 16
          %s1027 = scalar_select %p1026, %s1025, 16
          %s1028 = smul.u32 256, %s1027
          %s1030 = ssub.s32 4096, %s1028
          %1031 = vsyncadd %s1017, %s1030
          %p1032 = scmp.ne.s32.totalorder 0, %s1028
          %s1033 = smul.addr %s25, 36
          %s1034 = sadd.s32 %s1024, %s1033
          %s1035 = smul.addr %s1034, 128
          %s1036 = scalar_lea.hbm %s4, %s1035
          %s1037 = smul.u32 %s1027, 8
          %s1038 = smul.u32 %s1037, 2
          %s1039 = sshll.u32 %s1020, 4
          %s1040 = int_to_ptr.vmem [resolvable:$true] %s1039
          %s1041 = sshll.u32 %s1038, 4
          %1045 = dma.vmem_to_hbm [thread:$0]  (%p1032), %s1040, %s1041, %s1036, %s1017, 2048, 2304, %s1037
        $region44: #{tpu_custom_call.1} parent=35 // pred_fallthru
          _
      $region36: #{tpu_custom_call.1} parent=5 // pred_fallthru
        _
      %p1046 = scmp.le.s32.totalorder 2, %s16
      // Predicated region
      $region45: #{tpu_custom_call.1} parent=5 // pred_check
        %p1047 = pneg %p1046
      $region46: #{tpu_custom_call.1} parent=5 // pred_check_branch
        %1049 = sbr.rel (%p1047) target = $region48
      $region47: #{tpu_custom_call.1} parent=5 // pred_region
        %s1050 = ssub.s32 %s16, 2
        // Predicated region
        $region49: #{tpu_custom_call.1} parent=47 // pred_check
          %p1051 = pneg %p155
        $region50: #{tpu_custom_call.1} parent=47 // pred_check_branch
          %1053 = sbr.rel (%p1051) target = $region52
        $region51: #{tpu_custom_call.1} parent=47 // pred_region
          %s1054 = sand.u32 %s140, 1
          %s1055 = scalar_lea.sflag [#allocation4], %s1054
          %s1056 = sand.u32 %s140, 1
          %s1057 = smul.addr %s1056, 256
          %s1058 = scalar_lea.vmem [#allocation5], %s1057
          %1059 = dma.done %s1055, 4096
        $region52: #{tpu_custom_call.1} parent=47 // pred_fallthru
          _
      $region48: #{tpu_custom_call.1} parent=5 // pred_fallthru
        _
    $region6: #{tpu_custom_call.1} parent=1 // loop_footer
      %s20 = sadd.s32 1, %s16
    $region7: #{tpu_custom_call.1} parent=1 // loop_footer_branch
      %15 = sbr.rel target = $region3
    $region8: #{tpu_custom_call.1} parent=1 // loop_exit
      _
    %1060 = vsyncpa [#allocation3], 1
    %s1061 = scalar_lea.sflag [#allocation3], 1
    %1062 = vsyncpa %s1061, 1
    %1063 = vsyncpa [#allocation4], 1
    %s1064 = scalar_lea.sflag [#allocation4], 1
    %1065 = vsyncpa %s1064, 1

</llo_original>
